<compile_context>
chip_gen: v5e
topology: v5e:2x2
jax: 0.10.0
libtpu: 0.0.40
codegen_flags: <defaults>
</compile_context>

<pallas_src>
import jax
import jax.numpy as jnp
from jax.experimental import pallas as pl
from jax.experimental.pallas import tpu as pltpu


def _round_up(x, m):
    return (x + m - 1) // m * m


def _patch_embed_kernel(x_ref, w_ref, b_ref, o_ref):
    # x_ref: [TM, K] patches tile, w_ref: [K, D] resident weight,
    # b_ref: [1, D] bias (f32),    o_ref: [TM, D] output tile.
    acc = jnp.dot(x_ref[...], w_ref[...], preferred_element_type=jnp.float32)
    o_ref[...] = (acc + b_ref[...]).astype(o_ref.dtype)


def _pick_tm(N, K, D, in_bytes, out_bytes, align):
    """Token-tile size: prefer an aligned divisor of N (no pad / no crop)."""
    budget = 40 * 1024 * 1024                       # conservative vs v7x 64 MiB VMEM
    resident = 2 * (K * D * in_bytes + D * 4)       # weight + bias (double-buffered alloc)
    per_row = 2 * (K * in_bytes + D * out_bytes)    # patches tile + output tile, x2 buffers
    cap = max(align, (budget - resident) // per_row)
    cap = min(cap, 2048 if in_bytes <= 2 else 1024)
    # Keep a handful of grid steps (megacore sharding on v7x, pipeline overlap)
    # while tiles stay big enough to amortize the ~0.35 us per-step overhead.
    cap = min(cap, max(512, _round_up((N + 3) // 4, align)))
    cap = max(align, cap // align * align)
    for t in range(cap, align - 1, -align):
        if N % t == 0:
            return t, N                              # exact tiling: no pad, no crop
    if N <= cap:
        return N, N                                  # single full-N block (any N allowed)
    return cap, _round_up(N, cap)                    # fallback: pad N, crop afterwards


def vit_patch_embed(x, weight, bias, patch_size, *, compute_dtype=jnp.bfloat16,
                    out_dtype=None):
    """Forward of VitPatchEmbed for ndim=2, channels_first=True, stride == patch_size.

    x:      [B, C, H, W]          (NCHW)
    weight: [D, C, ph, pw]        (PyTorch Conv2d weight layout)
    bias:   [D]
    compute_dtype: dtype of the streaming matmul operands (default bf16);
                   None keeps the input dtype. Accumulation / bias add are f32.
    out_dtype: output dtype (default: x.dtype).
    returns [B, H//ph, W//pw, D]  ("b ... c" layout, as the PyTorch forward)
    """
    B, C, H, W = x.shape
    D = weight.shape[0]
    ph, pw = patch_size
    assert H % ph == 0 and W % pw == 0, "resolution must be divisible by patch_size"
    Hp, Wp = H // ph, W // pw
    N = B * Hp * Wp
    K = C * ph * pw
    out_dtype = x.dtype if out_dtype is None else out_dtype

    # Patch extraction as reshape/transpose in (C, ph, pw) flatten order (matches
    # weight.reshape(D, K)). With allow_input_fusion below, XLA may fuse this
    # producer (and the bf16 cast) into the Pallas input instead of materializing it.
    patches = x.reshape(B, C, Hp, ph, Wp, pw).transpose(0, 2, 4, 1, 3, 5).reshape(N, K)
    w_mat = weight.reshape(D, K).T                   # [K, D]
    b_mat = bias.astype(jnp.float32).reshape(1, D)   # f32 bias add in-kernel

    if compute_dtype is not None:
        patches = patches.astype(compute_dtype)
        w_mat = w_mat.astype(compute_dtype)

    in_bytes = patches.dtype.itemsize
    out_bytes = jnp.dtype(out_dtype).itemsize
    align = 16 if in_bytes < 4 else 8                # bf16 (16,128) packing alignment

    TM, Np = _pick_tm(N, K, D, in_bytes, out_bytes, align)
    if Np != N:                                      # rare fallback path only
        patches = jnp.pad(patches, ((0, Np - N), (0, 0)))

    # Double-buffered working set + headroom; capped well under v7x's 64 MiB.
    vmem_need = 2 * (TM * K * in_bytes + K * D * in_bytes + D * 4 + TM * D * out_bytes)
    vmem_limit = int(min(max(vmem_need + (8 << 20), 32 << 20), 48 << 20))

    cost = pl.CostEstimate(
        flops=2 * N * K * D,
        transcendentals=0,
        bytes_accessed=(N * K * in_bytes + K * D * in_bytes + D * 4
                        + N * D * out_bytes),
    )

    out = pl.pallas_call(
        _patch_embed_kernel,
        out_shape=jax.ShapeDtypeStruct((Np, D), out_dtype),
        grid=(Np // TM,),                            # single (parallel) token axis
        in_specs=[
            pl.BlockSpec((TM, K), lambda i: (i, 0)),   # patches tile (K un-tiled)
            pl.BlockSpec((K, D), lambda i: (0, 0)),    # weight resident in VMEM
            pl.BlockSpec((1, D), lambda i: (0, 0)),    # bias resident in VMEM
        ],
        out_specs=pl.BlockSpec((TM, D), lambda i: (i, 0)),
        compiler_params=pltpu.CompilerParams(
            dimension_semantics=("parallel",),       # shards N across TCs on v7x
            vmem_limit_bytes=vmem_limit,
            allow_input_fusion=[True, False, False],  # fuse patch-extraction producer
        ),
        cost_estimate=cost,
    )(patches, w_mat, b_mat)

    if Np != N:
        out = out[:N]
    return out.reshape(B, Hp, Wp, D)


if __name__ == "__main__":
    # Config: resolution=(16,16), patch_size=8, num_channels=4, dim=32,
    # stride=None (-> stride == patch_size), channels_first=True.
    B, C, H, W = 2, 4, 16, 16
    D = 32
    patch = (8, 8)

    key = jax.random.PRNGKey(0)
    kx, kw, kb = jax.random.split(key, 3)

    x = jax.random.normal(kx, (B, C, H, W), dtype=jnp.float32)
    fan_in = C * patch[0] * patch[1]
    bound = 1.0 / (fan_in ** 0.5)
    weight = jax.random.uniform(kw, (D, C, patch[0], patch[1]),
                                dtype=jnp.float32, minval=-bound, maxval=bound)
    bias = jax.random.uniform(kb, (D,), dtype=jnp.float32,
                              minval=-bound, maxval=bound)

    # Reference: plain-JAX conv (same semantics as F.conv2d), then b c h w -> b h w c.
    ref = jax.lax.conv_general_dilated(
        x, weight, window_strides=patch, padding="VALID",
        dimension_numbers=("NCHW", "OIHW", "NCHW"),
    ) + bias.reshape(1, D, 1, 1)
    ref = jnp.transpose(ref, (0, 2, 3, 1))

    # Exact f32 path.
    fwd_f32 = jax.jit(lambda a, w, b: vit_patch_embed(a, w, b, patch, compute_dtype=None))
    out_f32 = jax.block_until_ready(fwd_f32(x, weight, bias))
    assert out_f32.shape == (B, H // patch[0], W // patch[1], D)
    assert jnp.allclose(out_f32, ref, atol=1e-5, rtol=1e-5)

    # Default path: bf16 streaming operands, f32 accumulate/bias inside the kernel.
    fwd_bf16 = jax.jit(lambda a, w, b: vit_patch_embed(a, w, b, patch))
    out_bf16 = jax.block_until_ready(fwd_bf16(x, weight, bias))
    assert out_bf16.shape == (B, H // patch[0], W // patch[1], D)
    assert jnp.allclose(out_bf16, ref, atol=5e-2, rtol=5e-2)

    print("KERNEL_OK")
</pallas_src>

<mosaic_0001>
module attributes {stable_mosaic.version = 11 : i64} {
  func.func @_patch_embed_kernel(%arg0: i32, %arg1: memref<8x256xf32, #tpu.memory_space<vmem>>, %arg2: memref<256x32xf32, #tpu.memory_space<vmem>>, %arg3: memref<1x32xf32, #tpu.memory_space<vmem>>, %arg4: memref<8x32xf32, #tpu.memory_space<vmem>>) attributes {dimension_semantics = [#tpu.dimension_semantics<parallel>], iteration_bounds = array<i64: 1>, scalar_prefetch = 0 : i64, scratch_operands = 0 : i64, tpu.core_type = #tpu.core_type<tc>, window_params = [{transform_indices = @transform_0, window_bounds = array<i64: 8, 256>}, {pipeline_mode = #tpu.pipeline_mode<synchronous>, transform_indices = @transform_1, window_bounds = array<i64: 256, 32>}, {pipeline_mode = #tpu.pipeline_mode<synchronous>, transform_indices = @transform_2, window_bounds = array<i64: 1, 32>}, {transform_indices = @transform_3, window_bounds = array<i64: 8, 32>}]} {
    %c0 = arith.constant 0 : index
    %c0_0 = arith.constant 0 : index
    %0 = vector.load %arg1[%c0, %c0_0] : memref<8x256xf32, #tpu.memory_space<vmem>>, vector<8x256xf32>
    %c0_1 = arith.constant 0 : index
    %c0_2 = arith.constant 0 : index
    %1 = vector.load %arg2[%c0_1, %c0_2] : memref<256x32xf32, #tpu.memory_space<vmem>>, vector<256x32xf32>
    %cst = arith.constant dense<0.000000e+00> : vector<8x32xf32>
    %2 = tpu.matmul %0, %1, %cst {dimension_numbers = #tpu.dot_dimension_numbers<[1], [0], [0], [1], [0, 0, 1, 1], [], []>} : vector<8x256xf32>, vector<256x32xf32>, vector<8x32xf32> -> vector<8x32xf32>
    %c0_3 = arith.constant 0 : index
    %c0_4 = arith.constant 0 : index
    %3 = vector.load %arg3[%c0_3, %c0_4] : memref<1x32xf32, #tpu.memory_space<vmem>>, vector<1x32xf32>
    %4 = vector.broadcast %3 : vector<1x32xf32> to vector<8x32xf32>
    %5 = arith.addf %2, %4 : vector<8x32xf32>
    %c0_5 = arith.constant 0 : index
    %c0_6 = arith.constant 0 : index
    %6 = vector.load %arg4[%c0_5, %c0_6] : memref<8x32xf32, #tpu.memory_space<vmem>>, vector<8x32xf32>
    tpu.vector_store %arg4[%c0_5, %c0_6], %5 {strides = array<i32>} : memref<8x32xf32, #tpu.memory_space<vmem>>, vector<8x32xf32>,
    return
  }
  func.func @transform_0(%arg0: i32) -> (i32, i32) {
    %c0_i32 = arith.constant 0 : i32
    %c0_i32_0 = arith.constant 0 : i32
    return %arg0, %c0_i32 : i32, i32
  }
  func.func @transform_1(%arg0: i32) -> (i32, i32) {
    %c0_i32 = arith.constant 0 : i32
    %c0_i32_0 = arith.constant 0 : i32
    %c0_i32_1 = arith.constant 0 : i32
    return %c0_i32, %c0_i32_0 : i32, i32
  }
  func.func @transform_2(%arg0: i32) -> (i32, i32) {
    %c0_i32 = arith.constant 0 : i32
    %c0_i32_0 = arith.constant 0 : i32
    %c0_i32_1 = arith.constant 0 : i32
    return %c0_i32, %c0_i32_0 : i32, i32
  }
  func.func @transform_3(%arg0: i32) -> (i32, i32) {
    %c0_i32 = arith.constant 0 : i32
    %c0_i32_0 = arith.constant 0 : i32
    return %arg0, %c0_i32 : i32, i32
  }
}

</mosaic_0001>

<llo_original>
// kernel: _lambda_.1
$region0: #{_lambda_.1}
  #allocation0 [shape = 'u32[]', space=smem, size = 0x4, offset = 0x4, fixed_abs, tag = 'smem constant byte address 0x4 - core index']
  #allocation1 [shape = 'u32[72,128]{1,0:T(1,128)}', space=vmem, size = 0x9000, scoped, tag = 'internal scratch']
  %s0 = inlined_call_operand.vmem [shape: f32[8,256], index: 0, kind: input, shape index: {}]
  %s1 = inlined_call_operand.vmem [shape: f32[256,32], index: 1, kind: input, shape index: {}]
  %s2 = inlined_call_operand.vmem [shape: f32[1,32], index: 2, kind: input, shape index: {}]
  %s3 = inlined_call_operand.hbm [shape: f32[8,32], index: 3, kind: output, shape index: {}]
  %s4 = sld [smem:[#allocation0]]
  $region22: #{_lambda_.1} parent=0
    _
  %s6 = ssub.s32 1, %s4
  %s7 = scalar_select 0, %s6, %s4
  $region1: #{_lambda_.1} parent=0
    #allocation2 [shape = 'u8[4096]{0}', space=vmem, size = 0x1000, scoped, tag = 'output window, operand 0, single buffered']
    #allocation3 [shape = 's32[1]{0}', space=sflag, size = 0x4, scoped, tag = 'scoped memory for _lambda_.1']
    %8 = vsyncpa [#allocation3], 0
    // Predicated region
    $region2: #{_lambda_.1} parent=1 // pred_check
      _
    $region3: #{_lambda_.1} parent=1 // pred_check_branch
      %10 = sbr.rel (0) target = $region5
    $region4: #{_lambda_.1} parent=1 // pred_region
      _
    $region5: #{_lambda_.1} parent=1 // pred_fallthru
      _
    // Predicated region
    $region6: #{_lambda_.1} parent=1 // pred_check
      _
    $region7: #{_lambda_.1} parent=1 // pred_check_branch
      %12 = sbr.rel (0) target = $region9
    $region8: #{_lambda_.1} parent=1 // pred_region
      _
    $region9: #{_lambda_.1} parent=1 // pred_fallthru
      _
    // Predicated region
    $region10: #{_lambda_.1} parent=1 // pred_check
      _
    $region11: #{_lambda_.1} parent=1 // pred_check_branch
      %14 = sbr.rel (0) target = $region13
    $region12: #{_lambda_.1} parent=1 // pred_region
      _
    $region13: #{_lambda_.1} parent=1 // pred_fallthru
      _
    %v15 = vld [vmem:[%s0] sm:$0xff]
    %v16 = vld [vmem:[%s0 + $0x8] sm:$0xff]
    %v17 = vld [vmem:[%s1] sm:$0xff]
    %v18 = vld [vmem:[%s1 + $0x8] sm:$0xff]
    %v19 = vld [vmem:[%s1 + $0x10] sm:$0xff]
    %v20 = vld [vmem:[%s1 + $0x18] sm:$0xff]
    %v21 = vld [vmem:[%s1 + $0x20] sm:$0xff]
    %v22 = vld [vmem:[%s1 + $0x28] sm:$0xff]
    %v23 = vld [vmem:[%s1 + $0x30] sm:$0xff]
    %v24 = vld [vmem:[%s1 + $0x38] sm:$0xff]
    %v25 = vld [vmem:[%s1 + $0x40] sm:$0xff]
    %v26 = vld [vmem:[%s1 + $0x48] sm:$0xff]
    %v27 = vld [vmem:[%s1 + $0x50] sm:$0xff]
    %v28 = vld [vmem:[%s1 + $0x58] sm:$0xff]
    %v29 = vld [vmem:[%s1 + $0x60] sm:$0xff]
    %v30 = vld [vmem:[%s1 + $0x68] sm:$0xff]
    %v31 = vld [vmem:[%s1 + $0x70] sm:$0xff]
    %v32 = vld [vmem:[%s1 + $0x78] sm:$0xff]
    %v33 = vld [vmem:[%s1 + $0x80] sm:$0xff]
    %v34 = vld [vmem:[%s1 + $0x88] sm:$0xff]
    %v35 = vld [vmem:[%s1 + $0x90] sm:$0xff]
    %v36 = vld [vmem:[%s1 + $0x98] sm:$0xff]
    %v37 = vld [vmem:[%s1 + $0xa0] sm:$0xff]
    %v38 = vld [vmem:[%s1 + $0xa8] sm:$0xff]
    %v39 = vld [vmem:[%s1 + $0xb0] sm:$0xff]
    %v40 = vld [vmem:[%s1 + $0xb8] sm:$0xff]
    %v41 = vld [vmem:[%s1 + $0xc0] sm:$0xff]
    %v42 = vld [vmem:[%s1 + $0xc8] sm:$0xff]
    %v43 = vld [vmem:[%s1 + $0xd0] sm:$0xff]
    %v44 = vld [vmem:[%s1 + $0xd8] sm:$0xff]
    %v45 = vld [vmem:[%s1 + $0xe0] sm:$0xff]
    %v46 = vld [vmem:[%s1 + $0xe8] sm:$0xff]
    %v47 = vld [vmem:[%s1 + $0xf0] sm:$0xff]
    %v48 = vld [vmem:[%s1 + $0xf8] sm:$0xff]
    %v49 = vld [vmem:[%s2] sm:$0x1]
    %v51 = vperm.slane %v49, 0
    %53 = vmatpush.msra.mxu0 %v32
    %54 = vmatpush.msra.mxu0 %v31
    %55 = vmatpush.msra.mxu0 %v30
    %56 = vmatpush.msra.mxu0 %v29
    %57 = vmatpush.msra.mxu0 %v28
    %58 = vmatpush.msra.mxu0 %v27
    %59 = vmatpush.msra.mxu0 %v26
    %60 = vmatpush.msra.mxu0 %v25
    %61 = vmatpush.msra.mxu0 %v24
    %62 = vmatpush.msra.mxu0 %v23
    %63 = vmatpush.msra.mxu0 %v22
    %64 = vmatpush.msra.mxu0 %v21
    %65 = vmatpush.msra.mxu0 %v20
    %66 = vmatpush.msra.mxu0 %v19
    %67 = vmatpush.msra.mxu0 %v18
    %68 = vmatpush.msra.mxu0 %v17
    %69 = vmatmul.f32.gmra.mxu0 %v15
    %v70 = vpop.f32.mrf.mxu0
    %v71 = vadd.f32 %v51, %v70
    %72 = vdwg.mxu0
    %73 = vmatpush.msra.mxu0 %v48
    %74 = vmatpush.msra.mxu0 %v47
    %75 = vmatpush.msra.mxu0 %v46
    %76 = vmatpush.msra.mxu0 %v45
    %77 = vmatpush.msra.mxu0 %v44
    %78 = vmatpush.msra.mxu0 %v43
    %79 = vmatpush.msra.mxu0 %v42
    %80 = vmatpush.msra.mxu0 %v41
    %81 = vmatpush.msra.mxu0 %v40
    %82 = vmatpush.msra.mxu0 %v39
    %83 = vmatpush.msra.mxu0 %v38
    %84 = vmatpush.msra.mxu0 %v37
    %85 = vmatpush.msra.mxu0 %v36
    %86 = vmatpush.msra.mxu0 %v35
    %87 = vmatpush.msra.mxu0 %v34
    %88 = vmatpush.msra.mxu0 %v33
    %89 = vmatmul.f32.gmra.mxu0 %v16
    %v90 = vpop.f32.mrf.mxu0
    %v91 = vadd.f32 %v71, %v90
    %92 = vdwg.mxu0
    %vm93 = vcmask 261120
    %94 = vst.msk [vmem:[#allocation2] sm:$0xff] %vm93, %v91
    // Predicated region
    $region14: #{_lambda_.1} parent=1 // pred_check
      _
    $region15: #{_lambda_.1} parent=1 // pred_check_branch
      %96 = sbr.rel (0) target = $region17
    $region16: #{_lambda_.1} parent=1 // pred_region
      %98 = vsyncadd [#allocation3], 0
      %s100 = sshll.u32 [#allocation2], 4
      %s101 = int_to_ptr.vmem [resolvable:$true] %s100
      %s102 = sshll.u32 %s3, 4
      %s103 = int_to_ptr.hbm [resolvable:$true] %s102
      %105 = dma.vmem_to_hbm [thread:$0]  %s101, 128, %s103, [#allocation3]
    $region17: #{_lambda_.1} parent=1 // pred_fallthru
      _
    // Predicated region
    $region18: #{_lambda_.1} parent=1 // pred_check
      _
    $region19: #{_lambda_.1} parent=1 // pred_check_branch
      %107 = sbr.rel (0) target = $region21
    $region20: #{_lambda_.1} parent=1 // pred_region
      %109 = dma.done [#allocation3], 128
    $region21: #{_lambda_.1} parent=1 // pred_fallthru
      _
    %110 = vsyncpa [#allocation3], 1

</llo_original>
